<compile_context>
chip_gen: v5e
topology: v5e:2x2
jax: 0.10.0
libtpu: 0.0.40
codegen_flags: <defaults>
</compile_context>

<pallas_src>
import numpy as np
import jax
import jax.numpy as jnp
from jax import lax
from jax.experimental import pallas as pl
from jax.experimental.pallas import tpu as pltpu

MIN_NORM = 1e-15          # geoopt MIN_NORM clamp
ATANH_CLIP = 1.0 - 1e-7   # artanh input clamp (applied in float32)

_TARGET_BLOCK_BYTES = 2 * 1024 * 1024   # per x/out block (double-buffered in+out)


def _meta_log_kernel(consts_ref, a_ref, x_ref, o_ref):
    """Grid = (batch_tile, component, pixel_tile).

    consts_ref : SMEM (G, 6) -> [-2k, -k, k^2*||a||^2, 1+k*||a||^2, sqrt(-k),
                                 (1+k*||a||^2)/sqrt(-k)]
    a_ref      : VMEM (1, cc, 1)      negated manifold point -p for component g
    x_ref      : VMEM (Bt, 1, cc, T)  pixels on the lane axis
    o_ref      : VMEM (Bt, 1, cc, T)
    """
    g = pl.program_id(1)
    neg2k    = consts_ref[g, 0]
    negk     = consts_ref[g, 1]
    k2a2     = consts_ref[g, 2]
    opka2    = consts_ref[g, 3]   # max(1 + k*||a||^2, MIN_NORM) == 2 / lambda_p
    sk       = consts_ref[g, 4]   # sqrt(-k)
    opka2_sk = consts_ref[g, 5]   # opka2 / sqrt(-k)

    x = x_ref[...].astype(jnp.float32)   # (Bt, 1, cc, T)
    a = a_ref[...].astype(jnp.float32)   # (1, cc, 1) -> broadcasts over Bt, T

    # Per-pixel reductions over the channel (sublane) axis -> (Bt, 1, 1, T).
    y2 = jnp.sum(x * x, axis=2, keepdims=True)
    ay = jnp.sum(a * x, axis=2, keepdims=True)

    # mobius_add(-p, x, k): only the numerator is materialized on the slab.
    # The denominator cancels against ||num|| * rden in the final normalization,
    # so it only enters through the artanh argument (a (Bt,1,1,T) quantity).
    t = 1.0 + neg2k * ay                                            # (Bt,1,1,T)
    num = (t + negk * y2) * a + opka2 * x                           # (Bt,1,cc,T)
    # Exact reciprocal (feeds the output ~1:1; must hold 1e-4 rel tolerance).
    rden = pl.reciprocal(jnp.maximum(t + k2a2 * y2, MIN_NORM))      # (Bt,1,1,T)

    # logmap_p(x) = opka2 * artanh(sk*||num||*rden)/sk * num/||num||
    nn = jnp.maximum(jnp.sum(num * num, axis=2, keepdims=True),
                     MIN_NORM * MIN_NORM)                           # (Bt,1,1,T)
    rnorm = lax.rsqrt(nn)                                           # 1/||num||
    sv = jnp.minimum(sk * (nn * rnorm) * rden, ATANH_CLIP)          # >= 0 always
    artanh = 0.5 * (jnp.log(1.0 + sv) - jnp.log(1.0 - sv))
    scale = artanh * opka2_sk * rnorm                               # (Bt,1,1,T)

    o_ref[...] = (num * scale).astype(o_ref.dtype)


def _largest_divisor_leq(n, cap):
    cap = max(1, min(n, cap))
    best, d = 1, 1
    while d * d <= n:
        if n % d == 0:
            for c in (d, n // d):
                if best < c <= cap:
                    best = c
        d += 1
    return best


def _choose_tiles(B, cc, HW, itemsize):
    """Pick (Bt, T): lane-dense pixel tile + batch folding up to the byte target."""
    if HW % 128 == 0:
        cap = max(1, _TARGET_BLOCK_BYTES // (cc * 128 * itemsize))
        T = 128 * _largest_divisor_leq(HW // 128, cap)
    else:
        # TODO(synk): non-multiple-of-128 spatial sizes (e.g. 5x5, 21x21 heads)
        # leave lanes under-utilized; a lane-dense fix needs an upstream HBM
        # layout change (B*HW or cc on the lane axis), i.e. a real transpose.
        T = HW
    cap_b = max(1, _TARGET_BLOCK_BYTES // (cc * T * itemsize))
    Bt = _largest_divisor_leq(B, cap_b)
    return Bt, T


def meta_log_layer(x, location, curvature, component_num):
    """x: (B, C, H, W) NCHW; location: (G, cc); curvature: (G,) with k < 0."""
    B, C, H, W = x.shape
    G = component_num
    assert C % G == 0
    cc = C // G
    HW = H * W

    # Free view of NCHW: (B, G, cc, H*W). No data movement.
    x4 = x.reshape(B, G, cc, HW)

    # ---- per-component constants, computed once (tiny: G x cc) in float32 ----
    k = curvature.astype(jnp.float32)                                    # (G,)
    # TODO(synk): positive-curvature (spherical) tan_k/artan_k branch not
    # implemented; curvature is assumed negative (hyperbolic) as in the model.
    sk = jnp.sqrt(-k)                                                    # (G,)
    loc = location.astype(jnp.float32)                                   # (G, cc)
    u_norm = jnp.maximum(
        jnp.sqrt(jnp.sum(loc * loc, axis=-1, keepdims=True)), MIN_NORM)  # (G, 1)
    p = (jnp.tanh(sk[:, None] * u_norm) / sk[:, None]) * (loc / u_norm)  # expmap0
    a = -p                                                               # (G, cc)
    a2 = jnp.sum(a * a, axis=-1)                                         # (G,)
    opka2 = jnp.maximum(1.0 + k * a2, MIN_NORM)                          # = 2/lambda_p
    consts = jnp.stack(
        [-2.0 * k, -k, k * k * a2, opka2, sk, opka2 / sk],
        axis=-1).astype(jnp.float32)                                     # (G, 6)
    a3 = a[:, :, None]                                                   # (G, cc, 1)

    itemsize = jnp.dtype(x.dtype).itemsize
    Bt, T = _choose_tiles(B, cc, HW, itemsize)

    out4 = pl.pallas_call(
        _meta_log_kernel,
        out_shape=jax.ShapeDtypeStruct((B, G, cc, HW), x.dtype),
        grid=(B // Bt, G, HW // T),
        in_specs=[
            pl.BlockSpec(memory_space=pltpu.MemorySpace.SMEM),             # consts
            pl.BlockSpec((1, cc, 1), lambda b, g, t: (g, 0, 0)),           # -p column
            pl.BlockSpec((Bt, 1, cc, T), lambda b, g, t: (b, g, 0, t)),    # x block
        ],
        out_specs=pl.BlockSpec((Bt, 1, cc, T), lambda b, g, t: (b, g, 0, t)),
        compiler_params=pltpu.CompilerParams(
            dimension_semantics=("parallel", "parallel", "parallel")),
    )(consts, a3, x4)

    # Free reshape back to NCHW.
    return out4.reshape(B, C, H, W)


# ---------------- pure-JAX reference (mirrors the PyTorch forward) ----------------

def _expmap0_ref(u, k):
    sk = jnp.sqrt(-k)
    un = jnp.maximum(jnp.sqrt(jnp.sum(u * u, axis=-1, keepdims=True)), MIN_NORM)
    return (jnp.tanh(sk * un) / sk) * (u / un)


def _logmap_ref(p, y, k):
    sk = jnp.sqrt(-k)
    a = -p
    a2 = jnp.sum(a * a, axis=-1, keepdims=True)
    y2 = jnp.sum(y * y, axis=-1, keepdims=True)
    ay = jnp.sum(a * y, axis=-1, keepdims=True)
    num = (1.0 - 2.0 * k * ay - k * y2) * a + (1.0 + k * a2) * y
    den = jnp.maximum(1.0 - 2.0 * k * ay + k * k * a2 * y2, MIN_NORM)
    sub = num / den
    sn = jnp.maximum(jnp.sqrt(jnp.sum(sub * sub, axis=-1, keepdims=True)), MIN_NORM)
    lam = 2.0 / jnp.maximum(1.0 + k * jnp.sum(p * p, axis=-1, keepdims=True), MIN_NORM)
    sv = jnp.clip(sk * sn, -ATANH_CLIP, ATANH_CLIP)
    artanh = 0.5 * jnp.log((1.0 + sv) / (1.0 - sv))
    return 2.0 * (artanh / sk) * sub / (lam * sn)


def ref_forward(x, location, curvature, component_num):
    B, C, H, W = x.shape
    cc = C // component_num
    outs = []
    for i in range(component_num):
        k = curvature[i]
        p = _expmap0_ref(location[i][None, :], k)                    # (1, cc)
        xi = x[:, i * cc:(i + 1) * cc]                               # (B, cc, H, W)
        xi = jnp.transpose(xi, (0, 3, 2, 1)).reshape(B * W * H, cc)  # torch.transpose(1,3).view
        yi = _logmap_ref(p, xi, k)
        yi = jnp.transpose(yi.reshape(B, W, H, cc), (0, 3, 2, 1))
        outs.append(yi)
    return jnp.concatenate(outs, axis=1)


if __name__ == "__main__":
    key = jax.random.PRNGKey(0)
    B, C, H, W = 2, 64, 16, 16
    component_num = 4
    cc = C // component_num

    kx, kl = jax.random.split(key)
    x = (0.05 * jax.random.normal(kx, (B, C, H, W))).astype(jnp.float32)
    # nn.Parameter location is zero-initialized in __init__; use small deterministic
    # nonzero values so the expmap0 / mobius-add path is actually exercised.
    location = (0.05 * jax.random.normal(kl, (component_num, cc))).astype(jnp.float32)
    curvature = jnp.array([-1.0, -0.5, -2.0, -0.25], dtype=jnp.float32)

    # float32 path
    out = meta_log_layer(x, location, curvature, component_num)
    out = jax.block_until_ready(out)
    ref = ref_forward(x, location, curvature, component_num)
    assert out.shape == (B, C, H, W) and out.dtype == jnp.float32
    np.testing.assert_allclose(np.asarray(out), np.asarray(ref), rtol=1e-4, atol=1e-5)

    # bfloat16 path (halves HBM traffic; compute stays f32 inside the kernel)
    xb = x.astype(jnp.bfloat16)
    outb = meta_log_layer(xb, location, curvature, component_num)
    outb = jax.block_until_ready(outb)
    refb = ref_forward(xb.astype(jnp.float32), location, curvature, component_num)
    assert outb.shape == (B, C, H, W) and outb.dtype == jnp.bfloat16
    np.testing.assert_allclose(np.asarray(outb.astype(jnp.float32)), np.asarray(refb),
                               rtol=3e-2, atol=3e-3)

    print("KERNEL_OK")
</pallas_src>

<mosaic_0001>
module attributes {stable_mosaic.version = 11 : i64} {
  func.func @_meta_log_kernel(%arg0: i32, %arg1: i32, %arg2: i32, %arg3: memref<4x6xf32, #tpu.memory_space<smem>>, %arg4: memref<1x16x1xf32, #tpu.memory_space<vmem>>, %arg5: memref<2x1x16x256xf32, #tpu.memory_space<vmem>>, %arg6: memref<2x1x16x256xf32, #tpu.memory_space<vmem>>) attributes {dimension_semantics = [#tpu.dimension_semantics<parallel>, #tpu.dimension_semantics<parallel>, #tpu.dimension_semantics<parallel>], iteration_bounds = array<i64: 1, 4, 1>, scalar_prefetch = 0 : i64, scratch_operands = 0 : i64, tpu.core_type = #tpu.core_type<tc>, window_params = [{transform_indices = @transform_0, window_bounds = array<i64: 4, 6>}, {transform_indices = @transform_1, window_bounds = array<i64: 1, 16, 1>}, {transform_indices = @transform_2, window_bounds = array<i64: 2, 1, 16, 256>}, {transform_indices = @transform_3, window_bounds = array<i64: 2, 1, 16, 256>}]} {
    %0 = arith.index_cast %arg1 : i32 to index
    %c0 = arith.constant 0 : index
    %1 = memref.load %arg3[%0, %c0] : memref<4x6xf32, #tpu.memory_space<smem>>
    %2 = arith.index_cast %arg1 : i32 to index
    %c1 = arith.constant 1 : index
    %3 = memref.load %arg3[%2, %c1] : memref<4x6xf32, #tpu.memory_space<smem>>
    %4 = arith.index_cast %arg1 : i32 to index
    %c2 = arith.constant 2 : index
    %5 = memref.load %arg3[%4, %c2] : memref<4x6xf32, #tpu.memory_space<smem>>
    %6 = arith.index_cast %arg1 : i32 to index
    %c3 = arith.constant 3 : index
    %7 = memref.load %arg3[%6, %c3] : memref<4x6xf32, #tpu.memory_space<smem>>
    %8 = arith.index_cast %arg1 : i32 to index
    %c4 = arith.constant 4 : index
    %9 = memref.load %arg3[%8, %c4] : memref<4x6xf32, #tpu.memory_space<smem>>
    %10 = arith.index_cast %arg1 : i32 to index
    %c5 = arith.constant 5 : index
    %11 = memref.load %arg3[%10, %c5] : memref<4x6xf32, #tpu.memory_space<smem>>
    %c0_0 = arith.constant 0 : index
    %c0_1 = arith.constant 0 : index
    %c0_2 = arith.constant 0 : index
    %c0_3 = arith.constant 0 : index
    %12 = vector.load %arg5[%c0_0, %c0_1, %c0_2, %c0_3] : memref<2x1x16x256xf32, #tpu.memory_space<vmem>>, vector<2x1x16x256xf32>
    %c0_4 = arith.constant 0 : index
    %c0_5 = arith.constant 0 : index
    %c0_6 = arith.constant 0 : index
    %13 = vector.load %arg4[%c0_4, %c0_5, %c0_6] : memref<1x16x1xf32, #tpu.memory_space<vmem>>, vector<1x16x1xf32>
    %14 = arith.mulf %12, %12 : vector<2x1x16x256xf32>
    %cst = arith.constant dense<0.000000e+00> : vector<2x1x256xf32>
    %15 = vector.multi_reduction <add>, %14, %cst [2] : vector<2x1x16x256xf32> to vector<2x1x256xf32>
    %16 = vector.shape_cast %15 : vector<2x1x256xf32> to vector<2x1x1x256xf32>
    %17 = vector.shape_cast %13 : vector<1x16x1xf32> to vector<1x1x16x1xf32>
    %18 = vector.broadcast %17 : vector<1x1x16x1xf32> to vector<2x1x16x256xf32>
    %19 = arith.mulf %18, %12 : vector<2x1x16x256xf32>
    %cst_7 = arith.constant dense<0.000000e+00> : vector<2x1x256xf32>
    %20 = vector.multi_reduction <add>, %19, %cst_7 [2] : vector<2x1x16x256xf32> to vector<2x1x256xf32>
    %21 = vector.shape_cast %20 : vector<2x1x256xf32> to vector<2x1x1x256xf32>
    %22 = vector.broadcast %1 : f32 to vector<2x1x1x256xf32>
    %23 = arith.mulf %22, %21 : vector<2x1x1x256xf32>
    %cst_8 = arith.constant 1.000000e+00 : f32
    %24 = vector.broadcast %cst_8 : f32 to vector<2x1x1x256xf32>
    %25 = arith.addf %24, %23 : vector<2x1x1x256xf32>
    %26 = vector.broadcast %3 : f32 to vector<2x1x1x256xf32>
    %27 = arith.mulf %26, %16 : vector<2x1x1x256xf32>
    %28 = arith.addf %25, %27 : vector<2x1x1x256xf32>
    %29 = vector.shape_cast %13 : vector<1x16x1xf32> to vector<1x1x16x1xf32>
    %30 = vector.broadcast %28 : vector<2x1x1x256xf32> to vector<2x1x16x256xf32>
    %31 = vector.broadcast %29 : vector<1x1x16x1xf32> to vector<2x1x16x256xf32>
    %32 = arith.mulf %30, %31 : vector<2x1x16x256xf32>
    %33 = vector.broadcast %7 : f32 to vector<2x1x16x256xf32>
    %34 = arith.mulf %33, %12 : vector<2x1x16x256xf32>
    %35 = arith.addf %32, %34 : vector<2x1x16x256xf32>
    %36 = vector.broadcast %5 : f32 to vector<2x1x1x256xf32>
    %37 = arith.mulf %36, %16 : vector<2x1x1x256xf32>
    %38 = arith.addf %25, %37 : vector<2x1x1x256xf32>
    %cst_9 = arith.constant 1.000000e-15 : f32
    %39 = vector.broadcast %cst_9 : f32 to vector<2x1x1x256xf32>
    %40 = arith.maximumf %38, %39 : vector<2x1x1x256xf32>
    %41 = tpu.reciprocal %40 : vector<2x1x1x256xf32> -> vector<2x1x1x256xf32>
    %42 = arith.mulf %35, %35 : vector<2x1x16x256xf32>
    %cst_10 = arith.constant dense<0.000000e+00> : vector<2x1x256xf32>
    %43 = vector.multi_reduction <add>, %42, %cst_10 [2] : vector<2x1x16x256xf32> to vector<2x1x256xf32>
    %44 = vector.shape_cast %43 : vector<2x1x256xf32> to vector<2x1x1x256xf32>
    %cst_11 = arith.constant 1.000000e-30 : f32
    %45 = vector.broadcast %cst_11 : f32 to vector<2x1x1x256xf32>
    %46 = arith.maximumf %44, %45 : vector<2x1x1x256xf32>
    %47 = math.rsqrt %46 : vector<2x1x1x256xf32>
    %48 = arith.mulf %46, %47 : vector<2x1x1x256xf32>
    %49 = vector.broadcast %9 : f32 to vector<2x1x1x256xf32>
    %50 = arith.mulf %49, %48 : vector<2x1x1x256xf32>
    %51 = arith.mulf %50, %41 : vector<2x1x1x256xf32>
    %cst_12 = arith.constant 0.99999988 : f32
    %52 = vector.broadcast %cst_12 : f32 to vector<2x1x1x256xf32>
    %53 = arith.minimumf %51, %52 : vector<2x1x1x256xf32>
    %cst_13 = arith.constant 1.000000e+00 : f32
    %54 = vector.broadcast %cst_13 : f32 to vector<2x1x1x256xf32>
    %55 = arith.addf %54, %53 : vector<2x1x1x256xf32>
    %56 = math.log %55 : vector<2x1x1x256xf32>
    %cst_14 = arith.constant 1.000000e+00 : f32
    %57 = vector.broadcast %cst_14 : f32 to vector<2x1x1x256xf32>
    %58 = arith.subf %57, %53 : vector<2x1x1x256xf32>
    %59 = math.log %58 : vector<2x1x1x256xf32>
    %60 = arith.subf %56, %59 : vector<2x1x1x256xf32>
    %cst_15 = arith.constant 5.000000e-01 : f32
    %61 = vector.broadcast %cst_15 : f32 to vector<2x1x1x256xf32>
    %62 = arith.mulf %61, %60 : vector<2x1x1x256xf32>
    %63 = vector.broadcast %11 : f32 to vector<2x1x1x256xf32>
    %64 = arith.mulf %62, %63 : vector<2x1x1x256xf32>
    %65 = arith.mulf %64, %47 : vector<2x1x1x256xf32>
    %66 = vector.broadcast %65 : vector<2x1x1x256xf32> to vector<2x1x16x256xf32>
    %67 = arith.mulf %35, %66 : vector<2x1x16x256xf32>
    %c0_16 = arith.constant 0 : index
    %c0_17 = arith.constant 0 : index
    %c0_18 = arith.constant 0 : index
    %c0_19 = arith.constant 0 : index
    %68 = vector.load %arg6[%c0_16, %c0_17, %c0_18, %c0_19] : memref<2x1x16x256xf32, #tpu.memory_space<vmem>>, vector<2x1x16x256xf32>
    tpu.vector_store %arg6[%c0_16, %c0_17, %c0_18, %c0_19], %67 {strides = array<i32>} : memref<2x1x16x256xf32, #tpu.memory_space<vmem>>, vector<2x1x16x256xf32>,
    return
  }
  func.func @transform_0(%arg0: i32, %arg1: i32, %arg2: i32) -> (i32, i32) {
    %c0_i32 = arith.constant 0 : i32
    %c0_i32_0 = arith.constant 0 : i32
    %c0_i32_1 = arith.constant 0 : i32
    return %c0_i32, %c0_i32_0 : i32, i32
  }
  func.func @transform_1(%arg0: i32, %arg1: i32, %arg2: i32) -> (i32, i32, i32) {
    %c0_i32 = arith.constant 0 : i32
    %c0_i32_0 = arith.constant 0 : i32
    %c0_i32_1 = arith.constant 0 : i32
    return %arg1, %c0_i32, %c0_i32_0 : i32, i32, i32
  }
  func.func @transform_2(%arg0: i32, %arg1: i32, %arg2: i32) -> (i32, i32, i32, i32) {
    %c0_i32 = arith.constant 0 : i32
    %c0_i32_0 = arith.constant 0 : i32
    return %arg0, %arg1, %c0_i32, %arg2 : i32, i32, i32, i32
  }
  func.func @transform_3(%arg0: i32, %arg1: i32, %arg2: i32) -> (i32, i32, i32, i32) {
    %c0_i32 = arith.constant 0 : i32
    %c0_i32_0 = arith.constant 0 : i32
    return %arg0, %arg1, %c0_i32, %arg2 : i32, i32, i32, i32
  }
}

</mosaic_0001>

<llo_original>
// kernel: tpu_custom_call.1
$region0: #{tpu_custom_call.1}
  #allocation0 [shape = 'u32[]', space=smem, size = 0x4, offset = 0x4, fixed_abs, tag = 'smem constant byte address 0x4 - core index']
  #allocation1 [shape = 'u32[72,128]{1,0:T(1,128)}', space=vmem, size = 0x9000, scoped, tag = 'internal scratch']
  #allocation8 [shape = 's32[]', space=sflag, size = 0x4, offset = 0, fixed_abs, tag = 'sflag constant byte address 0x0 - dummy sync flag']
  #allocation10 [shape = 's32[]', space=sflag, size = 0x4, offset = 0, fixed_abs, tag = 'sflag constant byte address 0x0 - dummy sync flag']
  %s0 = inlined_call_operand.vmem [shape: f32[4,6], index: 0, kind: input, shape index: {}]
  %s1 = inlined_call_operand.vmem [shape: f32[4,16,1], index: 1, kind: input, shape index: {}]
  %s2 = inlined_call_operand.hbm [shape: f32[2,4,16,256], index: 2, kind: input, shape index: {}]
  %s3 = inlined_call_operand.hbm [shape: f32[2,4,16,256], index: 3, kind: output, shape index: {}]
  %s4 = sld [smem:[#allocation0]]
  $region53: #{tpu_custom_call.1} parent=0
    _
  %s6 = ssub.s32 1, %s4
  %s7 = scalar_select 0, %s6, %s4
  $region1: #{tpu_custom_call.1} parent=0
    #allocation2 [shape = 'u8[2048]{0}', space=smem, size = 0x800, scoped, tag = 'input window, operand 0, single buffered']
    #allocation3 [shape = 's32[2]{0}', space=sflag, size = 0x8, scoped, tag = 'scoped memory for tpu_custom_call.1']
    #allocation4 [shape = 's32[2]{0}', space=sflag, size = 0x8, scoped, tag = 'scoped memory for tpu_custom_call.1']
    #allocation5 [shape = 's32[2]{0}', space=sflag, size = 0x8, scoped, tag = 'scoped memory for tpu_custom_call.1']
    #allocation6 [shape = 'u8[65536]{0}', space=vmem, size = 0x10000, scoped, tag = 'input window, operand 2']
    #allocation7 [shape = 'u8[65536]{0}', space=vmem, size = 0x10000, scoped, tag = 'output window, operand 0']
    %8 = vsyncpa [#allocation5], 0
    %9 = vsyncpa [#allocation3], 0
    %s10 = scalar_lea.sflag [#allocation3], 1
    %11 = vsyncpa %s10, 0
    %12 = vsyncpa [#allocation4], 0
    %s13 = scalar_lea.sflag [#allocation4], 1
    %14 = vsyncpa %s13, 0
    loop: start=0, step=1, limit=6
    $region2: #{tpu_custom_call.1} parent=1 // loop_pre_header
      _
    $region3: #{tpu_custom_call.1} parent=1 // loop_header
      %s16 = sphi 0, %s20
      %p17 = scmp.ge.s32.totalorder %s16, 6
      %s23 = sphi 0, %s42
      %s24 = sphi 0, %s38
      %s25 = sphi 0, %s34
      %s26 = sphi 0, %s23
      %s27 = sphi 0, %s24
      %s28 = sphi 0, %s25
      %s29 = sphi 0, %s26
      %s30 = sphi 0, %s27
      %s31 = sphi 0, %s28
      %s43 = sphi 0, %s43
      %s45 = sphi 0, %s43
      %s46 = sphi 0, %s45
      %s60 = sphi 0, %s46
      %s66 = sphi 0, %s68
      %s69 = sphi 0, %s66
      %s70 = sphi 0, %s69
      %s86 = sphi 0, %s70
      %s96 = sphi 0, %s98
      %s99 = sphi 0, %s96
      %s100 = sphi 0, %s99
      %s116 = sphi 0, %s100
      %s126 = sphi 0, %s128
      %s129 = sphi 0, %s126
      %s130 = sphi 0, %s129
      %s146 = sphi 0, %s130
    $region4: #{tpu_custom_call.1} parent=1 // loop_header_branch
      %19 = sbr.rel (%p17) target = $region8
    $region5: #{tpu_custom_call.1} parent=1 // loop_body
      %s21 = ssub.s32 %s16, 1
      %s22 = ssub.s32 %s16, 2
      %s32 = sadd.s32 1, %s25
      %p33 = scmp.ge.s32.totalorder %s32, 1
      %s34 = scalar_select %p33, 0, %s32
      %s35 = sadd.s32 1, %s24
      %s36 = scalar_select %p33, %s35, %s24
      %p37 = scmp.ge.s32.totalorder %s36, 4
      %s38 = scalar_select %p37, 0, %s36
      %s39 = sadd.s32 1, %s23
      %s40 = scalar_select %p37, %s39, %s23
      %p41 = scmp.ge.s32.totalorder %s40, 1
      %s42 = scalar_select %p41, 0, %s40
      %s44 = sadd.s32 %s43, 1
      %p47 = scmp.eq.s32.totalorder %s16, 3
      %p48 = scmp.ne.s32.totalorder %s43, %s45
      %p49 = scmp.eq.s32.totalorder %s16, 0
      %p50 = por %p48, %p49
      %p51 = scmp.ne.s32.totalorder %s43, %s45
      %p52 = scmp.eq.s32.totalorder %s21, 3
      %p53 = por %p51, %p52
      %p54 = scmp.ne.s32.totalorder %s45, %s46
      %p55 = scmp.eq.s32.totalorder %s21, 0
      %p56 = por %p54, %p55
      %p57 = scmp.ne.s32.totalorder %s45, %s46
      %p58 = scmp.eq.s32.totalorder %s22, 3
      %p59 = por %p57, %p58
      %p61 = scmp.ne.s32.totalorder %s46, %s60
      %p62 = scmp.eq.s32.totalorder %s22, 0
      %p63 = por %p61, %p62
      %s64 = ssub.s32 %s24, %s38
      %p65 = scmp.eq.s32.totalorder %s64, 0
      %s67 = sadd.s32 %s66, 1
      %s68 = scalar_select %p65, %s66, %s67
      %p71 = pneg %p65
      %p72 = scmp.eq.s32.totalorder %s16, 3
      %p73 = por %p71, %p72
      %p74 = scmp.ne.s32.totalorder %s66, %s69
      %p75 = scmp.eq.s32.totalorder %s16, 0
      %p76 = por %p74, %p75
      %p77 = scmp.ne.s32.totalorder %s66, %s69
      %p78 = scmp.eq.s32.totalorder %s21, 3
      %p79 = por %p77, %p78
      %p80 = scmp.ne.s32.totalorder %s69, %s70
      %p81 = scmp.eq.s32.totalorder %s21, 0
      %p82 = por %p80, %p81
      %p83 = scmp.ne.s32.totalorder %s69, %s70
      %p84 = scmp.eq.s32.totalorder %s22, 3
      %p85 = por %p83, %p84
      %p87 = scmp.ne.s32.totalorder %s70, %s86
      %p88 = scmp.eq.s32.totalorder %s22, 0
      %p89 = por %p87, %p88
      %s90 = ssub.s32 %s23, %s42
      %s91 = ssub.s32 %s24, %s38
      %s92 = sor.u32 %s90, %s91
      %s93 = ssub.s32 %s25, %s34
      %s94 = sor.u32 %s92, %s93
      %p95 = scmp.eq.s32.totalorder %s94, 0
      %s97 = sadd.s32 %s96, 1
      %s98 = scalar_select %p95, %s96, %s97
      %p101 = pneg %p95
      %p102 = scmp.eq.s32.totalorder %s16, 3
      %p103 = por %p101, %p102
      %p104 = scmp.ne.s32.totalorder %s96, %s99
      %p105 = scmp.eq.s32.totalorder %s16, 0
      %p106 = por %p104, %p105
      %p107 = scmp.ne.s32.totalorder %s96, %s99
      %p108 = scmp.eq.s32.totalorder %s21, 3
      %p109 = por %p107, %p108
      %p110 = scmp.ne.s32.totalorder %s99, %s100
      %p111 = scmp.eq.s32.totalorder %s21, 0
      %p112 = por %p110, %p111
      %p113 = scmp.ne.s32.totalorder %s99, %s100
      %p114 = scmp.eq.s32.totalorder %s22, 3
      %p115 = por %p113, %p114
      %p117 = scmp.ne.s32.totalorder %s100, %s116
      %p118 = scmp.eq.s32.totalorder %s22, 0
      %p119 = por %p117, %p118
      %s120 = ssub.s32 %s23, %s42
      %s121 = ssub.s32 %s24, %s38
      %s122 = sor.u32 %s120, %s121
      %s123 = ssub.s32 %s25, %s34
      %s124 = sor.u32 %s122, %s123
      %p125 = scmp.eq.s32.totalorder %s124, 0
      %s127 = sadd.s32 %s126, 1
      %s128 = scalar_select %p125, %s126, %s127
      %p131 = pneg %p125
      %p132 = scmp.eq.s32.totalorder %s16, 3
      %p133 = por %p131, %p132
      %p134 = scmp.ne.s32.totalorder %s126, %s129
      %p135 = scmp.eq.s32.totalorder %s16, 0
      %p136 = por %p134, %p135
      %p137 = scmp.ne.s32.totalorder %s126, %s129
      %p138 = scmp.eq.s32.totalorder %s21, 3
      %p139 = por %p137, %p138
      %p140 = scmp.ne.s32.totalorder %s129, %s130
      %p141 = scmp.eq.s32.totalorder %s21, 0
      %p142 = por %p140, %p141
      %p143 = scmp.ne.s32.totalorder %s129, %s130
      %p144 = scmp.eq.s32.totalorder %s22, 3
      %p145 = por %p143, %p144
      %p147 = scmp.ne.s32.totalorder %s130, %s146
      %p148 = scmp.eq.s32.totalorder %s22, 0
      %p149 = por %p147, %p148
      %p150 = scmp.le.s32.totalorder 1, %s16
      %p151 = scmp.lt.s32.totalorder %s16, 5
      %p152 = pnand %p150, %p151
      %p153 = pneg %p152
      // Predicated region
      $region9: #{tpu_custom_call.1} parent=5 // pred_check
        _
      $region10: #{tpu_custom_call.1} parent=5 // pred_check_branch
        %155 = sbr.rel (%p152) target = $region12
      $region11: #{tpu_custom_call.1} parent=5 // pred_region
        %s156 = ssub.s32 %s16, 1
        // Predicated region
        $region13: #{tpu_custom_call.1} parent=11 // pred_check
          %p157 = pneg %p56
        $region14: #{tpu_custom_call.1} parent=11 // pred_check_branch
          %159 = sbr.rel (%p157) target = $region16
        $region15: #{tpu_custom_call.1} parent=11 // pred_region
          %161 = vsyncadd [#allocation5], 0
          %s163 = sshll.u32 %s0, 4
          %s164 = int_to_ptr.vmem [resolvable:$true] %s163
          %166 = dma.vmem_to_smem %s164, 64, [#allocation2], [#allocation5]
        $region16: #{tpu_custom_call.1} parent=11 // pred_fallthru
          _
      $region12: #{tpu_custom_call.1} parent=5 // pred_fallthru
        _
      %p167 = scmp.lt.s32.totalorder %s16, 4
      // Predicated region
      $region17: #{tpu_custom_call.1} parent=5 // pred_check
        %p168 = pneg %p167
      $region18: #{tpu_custom_call.1} parent=5 // pred_check_branch
        %170 = sbr.rel (%p168) target = $region20
      $region19: #{tpu_custom_call.1} parent=5 // pred_region
        // Predicated region
        $region21: #{tpu_custom_call.1} parent=19 // pred_check
          %p171 = pneg %p76
        $region22: #{tpu_custom_call.1} parent=19 // pred_check_branch
          %173 = sbr.rel (%p171) target = $region24
        $region23: #{tpu_custom_call.1} parent=19 // pred_region
          %p174 = scmp.lt.s32.totalorder %s24, 3
          %s175 = scalar_select %p174, %s24, 3
          %s176 = smul.addr %s175, 2
          %s177 = smul.addr %s176, 8
          %s178 = scalar_lea.vmem %s1, %s177
        $region24: #{tpu_custom_call.1} parent=19 // pred_fallthru
          _
        // Predicated region
        $region25: #{tpu_custom_call.1} parent=19 // pred_check
          %p179 = pneg %p106
        $region26: #{tpu_custom_call.1} parent=19 // pred_check_branch
          %181 = sbr.rel (%p179) target = $region28
        $region27: #{tpu_custom_call.1} parent=19 // pred_region
          #allocation9 [shape = 'u32[6]{0}', space=smem, size = 0x18, scoped, tag = 'DMA stride descriptor']
          %s182 = sand.u32 %s96, 1
          %s183 = scalar_lea.sflag [#allocation3], %s182
          %s184 = sand.u32 %s96, 1
          %s185 = smul.addr %s184, 64
          %s186 = scalar_lea.vmem [#allocation6], %s185
          %s187 = smul.u32 2, %s23
          %s188 = smul.u32 2, %s25
          %190 = vsyncadd %s183, 0
          %s191 = smul.addr %s24, 4
          %s192 = sadd.s32 %s188, %s191
          %s193 = smul.addr %s187, 16
          %s194 = sadd.s32 %s192, %s193
          %s195 = smul.addr %s194, 8
          %s196 = scalar_lea.hbm %s2, %s195
          %s198 = sshll.u32 1, 14
          %s199 = sxor.u32 4294967295, %s198
          %s201 = sld [smem:[#allocation0]]
          %s202 = sadd.s32 2, %s201
          %s204 = sshll.u32 7, 26
          %s205 = sxor.u32 4294967295, %s204
          %s206 = sand.u32 0, %s205
          %s207 = sshll.u32 %s202, 26
          %s208 = sor.u32 %s206, %s207
          %s209 = sshll.u32 %s196, 4
          %s210 = int_to_ptr.hbm [resolvable:$true] %s209
          %s211 = sshll.u32 %s186, 4
          %s212 = int_to_ptr.vmem [resolvable:$true] %s211
          %218 = sst [smem:[#allocation9]] 2048
          %s219 = scalar_lea.smem [#allocation9], 1
          %220 = sst [smem:[%s219]] 512
          %s221 = scalar_lea.smem [#allocation9], 2
          %222 = sst [smem:[%s221]] 2
          %s223 = scalar_lea.smem [#allocation9], 3
          %224 = sst [smem:[%s223]] 256
          %s225 = scalar_lea.smem [#allocation9], 4
          %226 = sst [smem:[%s225]] 256
          %s227 = scalar_lea.smem [#allocation9], 5
          %228 = sst [smem:[%s227]] 16
          %230 = dma.general %s210, 1024, %s212, %s183, [#allocation8], [#allocation9], %s208, 0
        $region28: #{tpu_custom_call.1} parent=19 // pred_fallthru
          _
      $region20: #{tpu_custom_call.1} parent=5 // pred_fallthru
        _
      %p231 = scmp.le.s32.totalorder 1, %s16
      %p232 = scmp.lt.s32.totalorder %s16, 5
      %p233 = pnand %p231, %p232
      %p234 = pneg %p233
      // Predicated region
      $region29: #{tpu_custom_call.1} parent=5 // pred_check
        _
      $region30: #{tpu_custom_call.1} parent=5 // pred_check_branch
        %236 = sbr.rel (%p233) target = $region32
      $region31: #{tpu_custom_call.1} parent=5 // pred_region
        %s237 = ssub.s32 %s16, 1
        // Predicated region
        $region33: #{tpu_custom_call.1} parent=31 // pred_check
          %p238 = pneg %p56
        $region34: #{tpu_custom_call.1} parent=31 // pred_check_branch
          %240 = sbr.rel (%p238) target = $region36
        $region35: #{tpu_custom_call.1} parent=31 // pred_region
          %242 = dma.done [#allocation5], 64
        $region36: #{tpu_custom_call.1} parent=31 // pred_fallthru
          _
        %s243 = sand.u32 %s99, 1
        %s244 = scalar_lea.sflag [#allocation3], %s243
        %s245 = sand.u32 %s99, 1
        %s246 = smul.addr %s245, 64
        %s247 = scalar_lea.vmem [#allocation6], %s246
        // Predicated region
        $region37: #{tpu_custom_call.1} parent=31 // pred_check
          %p248 = pneg %p112
        $region38: #{tpu_custom_call.1} parent=31 // pred_check_branch
          %250 = sbr.rel (%p248) target = $region40
        $region39: #{tpu_custom_call.1} parent=31 // pred_region
          %252 = dma.done %s244, 1024
        $region40: #{tpu_custom_call.1} parent=31 // pred_fallthru
          _
        %253 = sfence
        %p254 = pneg %p56
        %p255 = pneg %p53
        %p256 = scmp.lt.s32.totalorder %s27, 3
        %s257 = scalar_select %p256, %s27, 3
        %s258 = smul.addr %s257, 2
        %s259 = smul.addr %s258, 8
        %s260 = scalar_lea.vmem %s1, %s259
        %p261 = pneg %p82
        %p262 = pneg %p79
        %s263 = sand.u32 %s99, 1
        %s264 = scalar_lea.sflag [#allocation3], %s263
        %s265 = sand.u32 %s99, 1
        %s266 = smul.addr %s265, 64
        %s267 = scalar_lea.vmem [#allocation6], %s266
        %p268 = pneg %p112
        %p269 = pneg %p109
        %p270 = pneg %p142
        %p271 = pneg %p139
        %s272 = sand.u32 %s129, 1
        %s273 = scalar_lea.sflag [#allocation4], %s272
        %s274 = sand.u32 %s129, 1
        %s275 = smul.addr %s274, 64
        %s276 = scalar_lea.vmem [#allocation7], %s275
        %p277 = scmp.lt.s32.totalorder %s27, 3
        %s278 = scalar_select %p277, %s27, 3
        %s279 = smul.addr %s278, 2
        %s280 = smul.addr %s279, 8
        %s281 = scalar_lea.vmem %s1, %s280
        %s282 = smul.u32 2, %s26
        %s283 = smul.u32 2, %s28
        %s284 = smul.u32 2, %s26
        %s285 = smul.u32 2, %s28
        %s286 = smul.u32 %s27, 128
        %s287 = sld [smem:[#allocation2 + %s286]]
        %s288 = sadd.s32 %s286, 1
        %s289 = sld [smem:[#allocation2 + %s288]]
        %s290 = sadd.s32 %s286, 2
        %s291 = sld [smem:[#allocation2 + %s290]]
        %s292 = sadd.s32 %s286, 3
        %s293 = sld [smem:[#allocation2 + %s292]]
        %s294 = sadd.s32 %s286, 4
        %s295 = sld [smem:[#allocation2 + %s294]]
        %s296 = sadd.s32 %s286, 5
        %s297 = sld [smem:[#allocation2 + %s296]]
        %v298 = vld [vmem:[%s247] sm:$0xff]
        %v299 = vld [vmem:[%s247 + $0x8] sm:$0xff]
        %v300 = vld [vmem:[%s247 + $0x10] sm:$0xff]
        %v301 = vld [vmem:[%s247 + $0x18] sm:$0xff]
        %v302 = vld [vmem:[%s247 + $0x20] sm:$0xff]
        %v303 = vld [vmem:[%s247 + $0x28] sm:$0xff]
        %v304 = vld [vmem:[%s247 + $0x30] sm:$0xff]
        %v305 = vld [vmem:[%s247 + $0x38] sm:$0xff]
        %v306 = vld [vmem:[%s281] sm:$0xff]
        %v307 = vld [vmem:[%s281 + $0x8] sm:$0xff]
        %v308 = vmul.f32 %v298, %v298
        %v309 = vmul.f32 %v299, %v299
        %v310 = vmul.f32 %v300, %v300
        %v311 = vmul.f32 %v301, %v301
        %v312 = vmul.f32 %v302, %v302
        %v313 = vmul.f32 %v303, %v303
        %v314 = vmul.f32 %v304, %v304
        %v315 = vmul.f32 %v305, %v305
        %v316 = vadd.f32 %v308, %v310
        %v317 = vrot.slane %v316, 4
        %v318 = vadd.f32 %v316, %v317
        %v319 = vrot.slane %v318, 2
        %v320 = vadd.f32 %v318, %v319
        %v321 = vrot.slane %v320, 1
        %v322 = vadd.f32 %v320, %v321
        %v323 = vadd.f32 %v309, %v311
        %v324 = vrot.slane %v323, 4
        %v325 = vadd.f32 %v323, %v324
        %v326 = vrot.slane %v325, 2
        %v327 = vadd.f32 %v325, %v326
        %v328 = vrot.slane %v327, 1
        %v329 = vadd.f32 %v327, %v328
        %v330 = vadd.f32 %v312, %v314
        %v331 = vrot.slane %v330, 4
        %v332 = vadd.f32 %v330, %v331
        %v333 = vrot.slane %v332, 2
        %v334 = vadd.f32 %v332, %v333
        %v335 = vrot.slane %v334, 1
        %v336 = vadd.f32 %v334, %v335
        %v337 = vadd.f32 %v313, %v315
        %v338 = vrot.slane %v337, 4
        %v339 = vadd.f32 %v337, %v338
        %v340 = vrot.slane %v339, 2
        %v341 = vadd.f32 %v339, %v340
        %v342 = vrot.slane %v341, 1
        %v343 = vadd.f32 %v341, %v342
        %345 = vset.pattern.permute.xlu0 0
        %346 = vperm.xlu0 %345, %v306
        %v347 = vpop.permute.xlu0 %346
        %350 = vset.pattern.permute.xlu0 0
        %351 = vperm.xlu0 %350, %v307
        %v352 = vpop.permute.xlu0 %351
        %v354 = vmul.f32 %v347, %v298
        %v355 = vmul.f32 %v347, %v299
        %v356 = vmul.f32 %v352, %v300
        %v357 = vmul.f32 %v352, %v301
        %v358 = vmul.f32 %v347, %v302
        %v359 = vmul.f32 %v347, %v303
        %v360 = vmul.f32 %v352, %v304
        %v361 = vmul.f32 %v352, %v305
        %v362 = vadd.f32 %v354, %v356
        %v363 = vrot.slane %v362, 4
        %v364 = vadd.f32 %v362, %v363
        %v365 = vrot.slane %v364, 2
        %v366 = vadd.f32 %v364, %v365
        %v367 = vrot.slane %v366, 1
        %v368 = vadd.f32 %v366, %v367
        %v369 = vadd.f32 %v355, %v357
        %v370 = vrot.slane %v369, 4
        %v371 = vadd.f32 %v369, %v370
        %v372 = vrot.slane %v371, 2
        %v373 = vadd.f32 %v371, %v372
        %v374 = vrot.slane %v373, 1
        %v375 = vadd.f32 %v373, %v374
        %v376 = vadd.f32 %v358, %v360
        %v377 = vrot.slane %v376, 4
        %v378 = vadd.f32 %v376, %v377
        %v379 = vrot.slane %v378, 2
        %v380 = vadd.f32 %v378, %v379
        %v381 = vrot.slane %v380, 1
        %v382 = vadd.f32 %v380, %v381
        %v383 = vadd.f32 %v359, %v361
        %v384 = vrot.slane %v383, 4
        %v385 = vadd.f32 %v383, %v384
        %v386 = vrot.slane %v385, 2
        %v387 = vadd.f32 %v385, %v386
        %v388 = vrot.slane %v387, 1
        %v389 = vadd.f32 %v387, %v388
        %v390 = vstv %s287
        %v391 = vmul.f32 %v390, %v368
        %v392 = vmul.f32 %v390, %v375
        %v393 = vmul.f32 %v390, %v382
        %v394 = vmul.f32 %v390, %v389
        %v395 = vadd.f32 %v391, 1.0
        %v396 = vadd.f32 %v392, 1.0
        %v397 = vadd.f32 %v393, 1.0
        %v398 = vadd.f32 %v394, 1.0
        %v399 = vstv %s289
        %v400 = vmul.f32 %v399, %v322
        %v401 = vmul.f32 %v399, %v329
        %v402 = vmul.f32 %v399, %v336
        %v403 = vmul.f32 %v399, %v343
        %v404 = vadd.f32 %v395, %v400
        %v405 = vadd.f32 %v396, %v401
        %v406 = vadd.f32 %v397, %v402
        %v407 = vadd.f32 %v398, %v403
        %v408 = vmul.f32 %v404, %v347
        %v409 = vmul.f32 %v405, %v347
        %v410 = vmul.f32 %v404, %v352
        %v411 = vmul.f32 %v405, %v352
        %v412 = vmul.f32 %v406, %v347
        %v413 = vmul.f32 %v407, %v347
        %v414 = vmul.f32 %v406, %v352
        %v415 = vmul.f32 %v407, %v352
        %v416 = vstv %s293
        %v417 = vmul.f32 %v416, %v298
        %v418 = vmul.f32 %v416, %v299
        %v419 = vmul.f32 %v416, %v300
        %v420 = vmul.f32 %v416, %v301
        %v421 = vmul.f32 %v416, %v302
        %v422 = vmul.f32 %v416, %v303
        %v423 = vmul.f32 %v416, %v304
        %v424 = vmul.f32 %v416, %v305
        %v425 = vadd.f32 %v408, %v417
        %v426 = vadd.f32 %v409, %v418
        %v427 = vadd.f32 %v410, %v419
        %v428 = vadd.f32 %v411, %v420
        %v429 = vadd.f32 %v412, %v421
        %v430 = vadd.f32 %v413, %v422
        %v431 = vadd.f32 %v414, %v423
        %v432 = vadd.f32 %v415, %v424
        %v433 = vstv %s291
        %v434 = vmul.f32 %v433, %v322
        %v435 = vmul.f32 %v433, %v329
        %v436 = vmul.f32 %v433, %v336
        %v437 = vmul.f32 %v433, %v343
        %v438 = vadd.f32 %v395, %v434
        %v439 = vadd.f32 %v396, %v435
        %v440 = vadd.f32 %v397, %v436
        %v441 = vadd.f32 %v398, %v437
        %v442 = vmax.f32 %v438, 1e-15
        %v443 = vmax.f32 %v439, 1e-15
        %v444 = vmax.f32 %v440, 1e-15
        %v445 = vmax.f32 %v441, 1e-15
        %v446 = vrcp.pop %v442
        %v447 = vmul.f32 %v442, %v446
        %v448 = vsub.f32 1.0, %v447
        %v449 = vmul.f32 %v446, %v448
        %v450 = vadd.f32 %v446, %v449
        %vm451 = vweird.f32 %v442
        %vm452 = vweird.f32 %v446
        %vm453 = vmor %vm451, %vm452
        %v454 = vsel %vm453, %v446, %v450
        %v455 = vand.u32 2147483647, %v442
        %vm456 = vcmp.eq.f32.partialorder %v455, 8.507059e+37
        %v457 = vand.u32 %v442, 2147483648
        %v458 = vor.u32 1.1754944e-38, %v457
        %v459 = vsel %vm456, %v458, %v454
        %v460 = vrcp.pop %v443
        %v461 = vmul.f32 %v443, %v460
        %v462 = vsub.f32 1.0, %v461
        %v463 = vmul.f32 %v460, %v462
        %v464 = vadd.f32 %v460, %v463
        %vm465 = vweird.f32 %v443
        %vm466 = vweird.f32 %v460
        %vm467 = vmor %vm465, %vm466
        %v468 = vsel %vm467, %v460, %v464
        %v469 = vand.u32 2147483647, %v443
        %vm470 = vcmp.eq.f32.partialorder %v469, 8.507059e+37
        %v471 = vand.u32 %v443, 2147483648
        %v472 = vor.u32 1.1754944e-38, %v471
        %v473 = vsel %vm470, %v472, %v468
        %v474 = vrcp.pop %v444
        %v475 = vmul.f32 %v444, %v474
        %v476 = vsub.f32 1.0, %v475
        %v477 = vmul.f32 %v474, %v476
        %v478 = vadd.f32 %v474, %v477
        %vm479 = vweird.f32 %v444
        %vm480 = vweird.f32 %v474
        %vm481 = vmor %vm479, %vm480
        %v482 = vsel %vm481, %v474, %v478
        %v483 = vand.u32 2147483647, %v444
        %vm484 = vcmp.eq.f32.partialorder %v483, 8.507059e+37
        %v485 = vand.u32 %v444, 2147483648
        %v486 = vor.u32 1.1754944e-38, %v485
        %v487 = vsel %vm484, %v486, %v482
        %v488 = vrcp.pop %v445
        %v489 = vmul.f32 %v445, %v488
        %v490 = vsub.f32 1.0, %v489
        %v491 = vmul.f32 %v488, %v490
        %v492 = vadd.f32 %v488, %v491
        %vm493 = vweird.f32 %v445
        %vm494 = vweird.f32 %v488
        %vm495 = vmor %vm493, %vm494
        %v496 = vsel %vm495, %v488, %v492
        %v497 = vand.u32 2147483647, %v445
        %vm498 = vcmp.eq.f32.partialorder %v497, 8.507059e+37
        %v499 = vand.u32 %v445, 2147483648
        %v500 = vor.u32 1.1754944e-38, %v499
        %v501 = vsel %vm498, %v500, %v496
        %v502 = vmul.f32 %v425, %v425
        %v503 = vmul.f32 %v426, %v426
        %v504 = vmul.f32 %v427, %v427
        %v505 = vmul.f32 %v428, %v428
        %v506 = vmul.f32 %v429, %v429
        %v507 = vmul.f32 %v430, %v430
        %v508 = vmul.f32 %v431, %v431
        %v509 = vmul.f32 %v432, %v432
        %v510 = vadd.f32 %v502, %v504
        %v511 = vrot.slane %v510, 4
        %v512 = vadd.f32 %v510, %v511
        %v513 = vrot.slane %v512, 2
        %v514 = vadd.f32 %v512, %v513
        %v515 = vrot.slane %v514, 1
        %v516 = vadd.f32 %v514, %v515
        %v517 = vadd.f32 %v503, %v505
        %v518 = vrot.slane %v517, 4
        %v519 = vadd.f32 %v517, %v518
        %v520 = vrot.slane %v519, 2
        %v521 = vadd.f32 %v519, %v520
        %v522 = vrot.slane %v521, 1
        %v523 = vadd.f32 %v521, %v522
        %v524 = vadd.f32 %v506, %v508
        %v525 = vrot.slane %v524, 4
        %v526 = vadd.f32 %v524, %v525
        %v527 = vrot.slane %v526, 2
        %v528 = vadd.f32 %v526, %v527
        %v529 = vrot.slane %v528, 1
        %v530 = vadd.f32 %v528, %v529
        %v531 = vadd.f32 %v507, %v509
        %v532 = vrot.slane %v531, 4
        %v533 = vadd.f32 %v531, %v532
        %v534 = vrot.slane %v533, 2
        %v535 = vadd.f32 %v533, %v534
        %v536 = vrot.slane %v535, 1
        %v537 = vadd.f32 %v535, %v536
        %v538 = vmax.f32 %v516, 1e-30
        %v539 = vmax.f32 %v523, 1e-30
        %v540 = vmax.f32 %v530, 1e-30
        %v541 = vmax.f32 %v537, 1e-30
        %v542 = vrsqrt.pop %v538
        %v543 = vmul.f32 %v542, %v538
        %v544 = vmul.f32 %v543, %v542
        %v545 = vmul.f32 0.5, %v544
        %v546 = vsub.f32 1.5, %v545
        %v547 = vmul.f32 %v542, %v546
        %vm548 = vweird.f32 %v538
        %vm549 = vweird.f32 %v542
        %vm550 = vmor %vm548, %vm549
        %v551 = vsel %vm550, %v542, %v547
        %v552 = vrsqrt.pop %v539
        %v553 = vmul.f32 %v552, %v539
        %v554 = vmul.f32 %v553, %v552
        %v555 = vmul.f32 0.5, %v554
        %v556 = vsub.f32 1.5, %v555
        %v557 = vmul.f32 %v552, %v556
        %vm558 = vweird.f32 %v539
        %vm559 = vweird.f32 %v552
        %vm560 = vmor %vm558, %vm559
        %v561 = vsel %vm560, %v552, %v557
        %v562 = vrsqrt.pop %v540
        %v563 = vmul.f32 %v562, %v540
        %v564 = vmul.f32 %v563, %v562
        %v565 = vmul.f32 0.5, %v564
        %v566 = vsub.f32 1.5, %v565
        %v567 = vmul.f32 %v562, %v566
        %vm568 = vweird.f32 %v540
        %vm569 = vweird.f32 %v562
        %vm570 = vmor %vm568, %vm569
        %v571 = vsel %vm570, %v562, %v567
        %v572 = vrsqrt.pop %v541
        %v573 = vmul.f32 %v572, %v541
        %v574 = vmul.f32 %v573, %v572
        %v575 = vmul.f32 0.5, %v574
        %v576 = vsub.f32 1.5, %v575
        %v577 = vmul.f32 %v572, %v576
        %vm578 = vweird.f32 %v541
        %vm579 = vweird.f32 %v572
        %vm580 = vmor %vm578, %vm579
        %v581 = vsel %vm580, %v572, %v577
        %v582 = vmul.f32 %v538, %v551
        %v583 = vmul.f32 %v539, %v561
        %v584 = vmul.f32 %v540, %v571
        %v585 = vmul.f32 %v541, %v581
        %v586 = vstv %s295
        %v587 = vmul.f32 %v586, %v582
        %v588 = vmul.f32 %v586, %v583
        %v589 = vmul.f32 %v586, %v584
        %v590 = vmul.f32 %v586, %v585
        %v591 = vmul.f32 %v587, %v459
        %v592 = vmul.f32 %v588, %v473
        %v593 = vmul.f32 %v589, %v487
        %v594 = vmul.f32 %v590, %v501
        %v595 = vmin.f32 %v591, 0.9999999
        %v596 = vmin.f32 %v592, 0.9999999
        %v597 = vmin.f32 %v593, 0.9999999
        %v598 = vmin.f32 %v594, 0.9999999
        %v599 = vadd.f32 %v595, 1.0
        %v600 = vadd.f32 %v596, 1.0
        %v601 = vadd.f32 %v597, 1.0
        %v602 = vadd.f32 %v598, 1.0
        %v603 = vlog2.pop %v599
        %v604 = vmul.f32 %v603, 0.6931472
        %v605 = vlog2.pop %v600
        %v606 = vmul.f32 %v605, 0.6931472
        %v607 = vlog2.pop %v601
        %v608 = vmul.f32 %v607, 0.6931472
        %v609 = vlog2.pop %v602
        %v610 = vmul.f32 %v609, 0.6931472
        %v611 = vsub.f32 1.0, %v595
        %v612 = vsub.f32 1.0, %v596
        %v613 = vsub.f32 1.0, %v597
        %v614 = vsub.f32 1.0, %v598
        %v615 = vlog2.pop %v611
        %v616 = vmul.f32 %v615, 0.6931472
        %v617 = vlog2.pop %v612
        %v618 = vmul.f32 %v617, 0.6931472
        %v619 = vlog2.pop %v613
        %v620 = vmul.f32 %v619, 0.6931472
        %v621 = vlog2.pop %v614
        %v622 = vmul.f32 %v621, 0.6931472
        %v623 = vsub.f32 %v604, %v616
        %v624 = vsub.f32 %v606, %v618
        %v625 = vsub.f32 %v608, %v620
        %v626 = vsub.f32 %v610, %v622
        %v627 = vmul.f32 %v623, 0.5
        %v628 = vmul.f32 %v624, 0.5
        %v629 = vmul.f32 %v625, 0.5
        %v630 = vmul.f32 %v626, 0.5
        %v631 = vstv %s297
        %v632 = vmul.f32 %v627, %v631
        %v633 = vmul.f32 %v628, %v631
        %v634 = vmul.f32 %v629, %v631
        %v635 = vmul.f32 %v630, %v631
        %v636 = vmul.f32 %v632, %v551
        %v637 = vmul.f32 %v633, %v561
        %v638 = vmul.f32 %v634, %v571
        %v639 = vmul.f32 %v635, %v581
        %v640 = vmul.f32 %v425, %v636
        %v641 = vmul.f32 %v426, %v637
        %v642 = vmul.f32 %v427, %v636
        %v643 = vmul.f32 %v428, %v637
        %v644 = vmul.f32 %v429, %v638
        %v645 = vmul.f32 %v430, %v639
        %v646 = vmul.f32 %v431, %v638
        %v647 = vmul.f32 %v432, %v639
        %648 = vst [vmem:[%s276] sm:$0xff] %v640
        %649 = vst [vmem:[%s276 + $0x8] sm:$0xff] %v641
        %650 = vst [vmem:[%s276 + $0x10] sm:$0xff] %v642
        %651 = vst [vmem:[%s276 + $0x18] sm:$0xff] %v643
        %652 = vst [vmem:[%s276 + $0x20] sm:$0xff] %v644
        %653 = vst [vmem:[%s276 + $0x28] sm:$0xff] %v645
        %654 = vst [vmem:[%s276 + $0x30] sm:$0xff] %v646
        %655 = vst [vmem:[%s276 + $0x38] sm:$0xff] %v647
        %s656 = sand.u32 %s129, 1
        %s657 = scalar_lea.sflag [#allocation4], %s656
        %s658 = sand.u32 %s129, 1
        %s659 = smul.addr %s658, 64
        %s660 = scalar_lea.vmem [#allocation7], %s659
        // Predicated region
        $region41: #{tpu_custom_call.1} parent=31 // pred_check
          %p661 = pneg %p139
        $region42: #{tpu_custom_call.1} parent=31 // pred_check_branch
          %663 = sbr.rel (%p661) target = $region44
        $region43: #{tpu_custom_call.1} parent=31 // pred_region
          #allocation11 [shape = 'u32[6]{0}', space=smem, size = 0x18, scoped, tag = 'DMA stride descriptor']
          %s664 = smul.u32 2, %s26
          %s665 = smul.u32 2, %s28
          %667 = vsyncadd %s657, 0
          %s668 = smul.addr %s27, 4
          %s669 = sadd.s32 %s665, %s668
          %s670 = smul.addr %s664, 16
          %s671 = sadd.s32 %s669, %s670
          %s672 = smul.addr %s671, 8
          %s673 = scalar_lea.hbm %s3, %s672
          %s675 = sshll.u32 1, 14
          %s676 = sxor.u32 4294967295, %s675
          %s679 = sshll.u32 7, 18
          %s680 = sxor.u32 4294967295, %s679
          %s681 = sand.u32 0, %s680
          %s683 = sor.u32 %s681, 0
          %s684 = sshll.u32 %s660, 4
          %s685 = int_to_ptr.vmem [resolvable:$true] %s684
          %s686 = sshll.u32 %s673, 4
          %s687 = int_to_ptr.hbm [resolvable:$true] %s686
          %693 = sst [smem:[#allocation11]] 512
          %s694 = scalar_lea.smem [#allocation11], 1
          %695 = sst [smem:[%s694]] 2048
          %s696 = scalar_lea.smem [#allocation11], 2
          %697 = sst [smem:[%s696]] 2
          %s698 = scalar_lea.smem [#allocation11], 3
          %699 = sst [smem:[%s698]] 256
          %s700 = scalar_lea.smem [#allocation11], 4
          %701 = sst [smem:[%s700]] 256
          %s702 = scalar_lea.smem [#allocation11], 5
          %703 = sst [smem:[%s702]] 16
          %705 = dma.general %s685, 1024, %s687, %s657, [#allocation10], [#allocation11], %s683, 0
        $region44: #{tpu_custom_call.1} parent=31 // pred_fallthru
          _
      $region32: #{tpu_custom_call.1} parent=5 // pred_fallthru
        _
      %p706 = scmp.le.s32.totalorder 2, %s16
      // Predicated region
      $region45: #{tpu_custom_call.1} parent=5 // pred_check
        %p707 = pneg %p706
      $region46: #{tpu_custom_call.1} parent=5 // pred_check_branch
        %709 = sbr.rel (%p707) target = $region48
      $region47: #{tpu_custom_call.1} parent=5 // pred_region
        %s710 = ssub.s32 %s16, 2
        // Predicated region
        $region49: #{tpu_custom_call.1} parent=47 // pred_check
          %p711 = pneg %p145
        $region50: #{tpu_custom_call.1} parent=47 // pred_check_branch
          %713 = sbr.rel (%p711) target = $region52
        $region51: #{tpu_custom_call.1} parent=47 // pred_region
          %s714 = sand.u32 %s130, 1
          %s715 = scalar_lea.sflag [#allocation4], %s714
          %s716 = sand.u32 %s130, 1
          %s717 = smul.addr %s716, 64
          %s718 = scalar_lea.vmem [#allocation7], %s717
          %720 = dma.done %s715, 1024
        $region52: #{tpu_custom_call.1} parent=47 // pred_fallthru
          _
      $region48: #{tpu_custom_call.1} parent=5 // pred_fallthru
        _
    $region6: #{tpu_custom_call.1} parent=1 // loop_footer
      %s20 = sadd.s32 1, %s16
    $region7: #{tpu_custom_call.1} parent=1 // loop_footer_branch
      %15 = sbr.rel target = $region3
    $region8: #{tpu_custom_call.1} parent=1 // loop_exit
      _
    %721 = vsyncpa [#allocation3], 1
    %s722 = scalar_lea.sflag [#allocation3], 1
    %723 = vsyncpa %s722, 1
    %724 = vsyncpa [#allocation4], 1
    %s725 = scalar_lea.sflag [#allocation4], 1
    %726 = vsyncpa %s725, 1
    %727 = vsyncpa [#allocation5], 1
    %s728 = scalar_lea.sflag [#allocation5], 1
    %729 = vsyncpa %s728, 1

</llo_original>
